<compile_context>
chip_gen: v6e
topology: v6e:2x2x1
jax: 0.10.0
libtpu: 0.0.40
codegen_flags: <defaults>
</compile_context>

<pallas_src>
import functools
import math

import jax
import jax.numpy as jnp
from jax.experimental import pallas as pl
from jax.experimental.pallas import tpu as pltpu

LRELU_SLOPE = 0.1

MPD_PERIODS = (2, 3, 5, 7, 11)
# (cout, cin, kernel_h, stride_h, pad_h) — width kernel/stride are 1/1, pad 0.
MPD_CFG = [
    (32, 1, 5, 3, 2),
    (128, 32, 5, 3, 2),
    (512, 128, 5, 3, 2),
    (1024, 512, 5, 3, 2),
    (1024, 1024, 5, 1, 2),
]
MPD_POST = (1, 1024, 3, 1, 1)

# (cout, cin, kernel, stride, pad, groups)
MSD_CFG = [
    (128, 1, 15, 1, 7, 1),
    (128, 128, 41, 2, 20, 4),
    (256, 128, 41, 2, 20, 16),
    (512, 256, 41, 4, 20, 16),
    (1024, 512, 41, 4, 20, 16),
    (1024, 1024, 41, 1, 20, 16),
    (1024, 1024, 5, 1, 2, 1),
]
MSD_POST = (1, 1024, 3, 1, 1, 1)


def _round_up(x, m):
    return (x + m - 1) // m * m


def _cdiv(a, b):
    return (a + b - 1) // b


def _pick_pack(groups, cg):
    """Smallest P dividing `groups` with P*cg lane-aligned (multiple of 128)."""
    if groups == 1:
        return 1
    for p in range(1, groups + 1):
        if groups % p == 0 and (p * cg) % 128 == 0:
            return p
    return groups  # fall back to a fully dense (block-diagonal) weight


# ----------------------------------------------------------------------------
# Fused (grouped) Conv1d + bias + LeakyReLU as ONE Pallas kernel
# ----------------------------------------------------------------------------
@functools.lru_cache(maxsize=None)
def _get_conv_fn(M_rows, T, Cin, Cout, K, stride, pad, groups, slope):
    """Jitted fn(x_cl, w, b) -> y_cl for a (grouped) Conv1d on channels-last data.

    x_cl: (M_rows, T, Cin) f32  ->  y_cl: (M_rows, Tout, Cout) f32.
    """
    Cg = Cin // groups
    Cog = Cout // groups
    P = _pick_pack(groups, Cg)          # groups packed per tile (block-diag weights)
    G_eff = groups // P
    Cg_eff = Cg * P
    Cog_eff = Cog * P
    Nblk = _round_up(Cog_eff, 128)      # lane-dense output block per packed group
    tn = 256 if Nblk % 256 == 0 else 128
    n_j = Nblk // tn

    Tp = T + 2 * pad
    Tout = (Tp - K) // stride + 1
    tm = min(256, _round_up(Tout, 8))
    Mtiles_b = _cdiv(Tout, tm)
    Mtiles_tot = M_rows * Mtiles_b

    # Tiny-contraction layers (Cin == 1): fold all taps into one small matmul
    # (im2col of a 1-channel signal is cheap) instead of K rank-1 updates.
    fold = Cg_eff < 8
    if fold:
        n_taps = 1
        Cg_blk = Cg_eff * K
        W_ph = tm
        sW = tm
        stride_k = 1
    else:
        n_taps = K
        Cg_blk = Cg_eff
        W_ph = _round_up(tm + (K - 1) // stride, 8)   # per-phase halo-window rows
        sW = stride * W_ph
        stride_k = stride

    def kernel(a_ref, w_ref, b_ref, o_ref):
        # Resident f32 output tile: init with the bias, accumulate one bf16 MXU
        # matmul per tap (static offsets into the halo window), fuse LeakyReLU.
        o_ref[...] = jnp.zeros_like(o_ref) + b_ref[0]
        for t in range(n_taps):
            off = (t % stride_k) * W_ph + (t // stride_k)
            a = a_ref[0, off:off + tm, :].astype(jnp.bfloat16)
            o_ref[...] += jnp.dot(a, w_ref[0, t],
                                  preferred_element_type=jnp.float32)
        if slope is not None:
            v = o_ref[...]
            o_ref[...] = jnp.where(v >= 0.0, v, slope * v)

    conv_call = pl.pallas_call(
        kernel,
        out_shape=jax.ShapeDtypeStruct((Mtiles_tot * tm, G_eff * Nblk), jnp.float32),
        grid_spec=pltpu.PrefetchScalarGridSpec(
            num_scalar_prefetch=0,
            grid=(G_eff, n_j, Mtiles_tot),
            in_specs=[
                # halo windows of the activation (block index invariant in j)
                pl.BlockSpec((1, sW, Cg_blk), lambda g, j, i: (i, 0, g)),
                # all K taps of the packed weight stay resident across the i axis
                pl.BlockSpec((1, n_taps, Cg_blk, tn), lambda g, j, i: (g, 0, 0, j)),
                pl.BlockSpec((1, 1, tn), lambda g, j, i: (g, 0, j)),
            ],
            out_specs=pl.BlockSpec((tm, tn), lambda g, j, i: (i, g * n_j + j)),
        ),
        compiler_params=pltpu.CompilerParams(
            dimension_semantics=("parallel", "parallel", "parallel")),
    )

    def impl(x_cl, w, bias):
        # --- weights: pack P groups block-diagonally -> lane-dense N, K-major taps.
        wgr = w.reshape(G_eff, P, Cog, Cg, K)
        eye = jnp.eye(P, dtype=w.dtype)
        wd = jnp.einsum('spock,pq->skqcpo', wgr, eye)
        wd = wd.reshape(G_eff, K, Cg_eff, Cog_eff)
        if fold:
            wd = wd.reshape(G_eff, 1, K * Cg_eff, Cog_eff)
        wd = jnp.pad(wd, ((0, 0), (0, 0), (0, 0), (0, Nblk - Cog_eff)))
        wd = wd.astype(jnp.bfloat16)
        bp = jnp.pad(bias.reshape(G_eff, Cog_eff),
                     ((0, 0), (0, Nblk - Cog_eff))).reshape(G_eff, 1, Nblk)
        bp = bp.astype(jnp.float32)

        # --- activations: halo windows (~1x the input, no K-fold im2col blow-up).
        if fold:
            max_idx = (Mtiles_b * tm - 1) * stride + (K - 1)
            extra = max(0, max_idx + 1 - Tp)
            xp = jnp.pad(x_cl, ((0, 0), (pad, pad + extra), (0, 0)))
            tidx = (jnp.arange(Mtiles_b * tm)[:, None] * stride
                    + jnp.arange(K)[None, :])
            win = xp[:, tidx, :]                                # (M, Mt*tm, K, Cin)
            win = win.reshape(Mtiles_tot, tm, K * Cin)
        else:
            max_idx = ((Mtiles_b - 1) * tm + (W_ph - 1)) * stride + (stride - 1)
            extra = max(0, max_idx + 1 - Tp)
            xp = jnp.pad(x_cl, ((0, 0), (pad, pad + extra), (0, 0)))
            tidx = ((jnp.arange(Mtiles_b)[:, None, None] * tm
                     + jnp.arange(W_ph)[None, None, :]) * stride
                    + jnp.arange(stride)[None, :, None])        # (Mt, s, W_ph)
            win = xp[:, tidx, :]                                # (M, Mt, s, W_ph, Cin)
            win = win.reshape(Mtiles_tot, sW, Cin)

        out = conv_call(win, wd, bp)                            # (Mtot*tm, G_eff*Nblk)
        out = out.reshape(M_rows, Mtiles_b * tm, G_eff, Nblk)
        out = out[:, :Tout, :, :Cog_eff].reshape(M_rows, Tout, Cout)
        return out

    return jax.jit(impl)


def conv1d_cl(x_cl, w, bias, *, stride, padding, groups=1, slope=None):
    """x_cl: (rows, T, Cin) channels-last; w: (Cout, Cin//groups, K); b: (Cout,)."""
    M_rows, T, Cin = x_cl.shape
    Cout, _, K = w.shape
    fn = _get_conv_fn(M_rows, T, Cin, Cout, K, stride, padding, groups, slope)
    return fn(x_cl, w, bias)


# ----------------------------------------------------------------------------
# Pathological layers kept off the MXU path (per performance feedback)
# ----------------------------------------------------------------------------
def _post_conv_cout1(x_cl, w, bias, pad):
    """Cout==1 post-convs: plain JAX reduction (avoid padding N 1->128)."""
    M, T, C = x_cl.shape
    K = w.shape[2]
    xp = jnp.pad(x_cl, ((0, 0), (pad, pad), (0, 0)))
    Tout = T + 2 * pad - K + 1
    out = jnp.full((M, Tout), bias[0], jnp.float32)
    for k in range(K):
        out = out + jnp.einsum('mtc,c->mt', xp[:, k:k + Tout, :], w[0, :, k])
    return out[..., None]


def avg_pool1d_4_2_2(x):
    """nn.AvgPool1d(4, 2, padding=2) (count_include_pad=True) on 1-channel audio."""
    T = x.shape[-1]
    xp = jnp.pad(x, ((0, 0), (0, 0), (2, 2)))
    idx = jnp.arange(T // 2 + 1) * 2
    return 0.25 * (xp[..., idx] + xp[..., idx + 1] + xp[..., idx + 2] + xp[..., idx + 3])


# ----------------------------------------------------------------------------
# Discriminator modules (activations stay channels-last between layers;
# NCT / NCHW transposes only for the returned feature maps)
# ----------------------------------------------------------------------------
def disc_p_forward(dp, period, x):
    B, _, T = x.shape
    if T % period != 0:
        n_pad = period - (T % period)
        x = jnp.pad(x, ((0, 0), (0, 0), (0, n_pad)), mode="reflect")
        T = T + n_pad
    H = T // period
    # width (period) folded into the row axis -> (B*period, H, 1) channels-last
    xcl = x.reshape(B, H, period).transpose(0, 2, 1).reshape(B * period, H, 1)
    fmap = []
    for (w, b), cfg in zip(dp["convs"], MPD_CFG):
        xcl = conv1d_cl(xcl, w, b, stride=cfg[3], padding=cfg[4], groups=1,
                        slope=LRELU_SLOPE)
        Hc, Cc = xcl.shape[1], xcl.shape[2]
        fmap.append(xcl.reshape(B, period, Hc, Cc).transpose(0, 3, 2, 1))  # NCHW
    w, b = dp["post"]
    xcl = _post_conv_cout1(xcl, w, b, pad=MPD_POST[4])
    Hc = xcl.shape[1]
    fmap.append(xcl.reshape(B, period, Hc, 1).transpose(0, 3, 2, 1))
    out = xcl.reshape(B, period, Hc).transpose(0, 2, 1).reshape(B, Hc * period)
    return out, fmap


def disc_s_forward(ds, x):
    B = x.shape[0]
    xcl = jnp.transpose(x, (0, 2, 1))  # (B, T, 1) channels-last
    fmap = []
    for (w, b), cfg in zip(ds["convs"], MSD_CFG):
        xcl = conv1d_cl(xcl, w, b, stride=cfg[3], padding=cfg[4], groups=cfg[5],
                        slope=LRELU_SLOPE)
        fmap.append(jnp.transpose(xcl, (0, 2, 1)))  # NCT
    w, b = ds["post"]
    xcl = _post_conv_cout1(xcl, w, b, pad=MSD_POST[4])
    fmap.append(jnp.transpose(xcl, (0, 2, 1)))
    out = xcl[:, :, 0]
    return out, fmap


def mpd_forward(mpd_params, y, y_hat):
    B = y.shape[0]
    yy = jnp.concatenate([y, y_hat], axis=0)   # one pass for real + generated
    y_d_rs, y_d_gs, fmap_rs, fmap_gs = [], [], [], []
    for period, dp in zip(MPD_PERIODS, mpd_params):
        out, fm = disc_p_forward(dp, period, yy)
        y_d_rs.append(out[:B])
        y_d_gs.append(out[B:])
        fmap_rs.append([f[:B] for f in fm])
        fmap_gs.append([f[B:] for f in fm])
    return y_d_rs, y_d_gs, fmap_rs, fmap_gs


def msd_forward(msd_params, y, y_hat):
    B = y.shape[0]
    yy = jnp.concatenate([y, y_hat], axis=0)
    y_d_rs, y_d_gs, fmap_rs, fmap_gs = [], [], [], []
    for i, ds in enumerate(msd_params):
        if i != 0:
            yy = avg_pool1d_4_2_2(yy)
        out, fm = disc_s_forward(ds, yy)
        y_d_rs.append(out[:B])
        y_d_gs.append(out[B:])
        fmap_rs.append([f[:B] for f in fm])
        fmap_gs.append([f[B:] for f in fm])
    return y_d_rs, y_d_gs, fmap_rs, fmap_gs


def discriminator_forward(params, y, y_hat):
    y_df_hat_r, y_df_hat_g, fmap_f_r, fmap_f_g = mpd_forward(params["mpd"], y, y_hat)
    y_ds_hat_r, y_ds_hat_g, fmap_s_r, fmap_s_g = msd_forward(params["msd"], y, y_hat)
    return (y_df_hat_r, y_df_hat_g, fmap_f_r, fmap_f_g,
            y_ds_hat_r, y_ds_hat_g, fmap_s_r, fmap_s_g)


# ----------------------------------------------------------------------------
# Deterministic parameter initialization (PyTorch-style uniform fan-in bounds)
# ----------------------------------------------------------------------------
def _conv_init(key, cout, cin_g, k):
    kw, kb = jax.random.split(key)
    bound = 1.0 / math.sqrt(cin_g * k)
    w = jax.random.uniform(kw, (cout, cin_g, k), jnp.float32, -bound, bound)
    b = jax.random.uniform(kb, (cout,), jnp.float32, -bound, bound)
    return w, b


def init_discriminator_params(key):
    params = {"mpd": [], "msd": []}
    for _ in MPD_PERIODS:
        key, sub = jax.random.split(key)
        keys = jax.random.split(sub, len(MPD_CFG) + 1)
        convs = [_conv_init(keys[i], c[0], c[1], c[2]) for i, c in enumerate(MPD_CFG)]
        post = _conv_init(keys[-1], MPD_POST[0], MPD_POST[1], MPD_POST[2])
        params["mpd"].append({"convs": convs, "post": post})
    for _ in range(3):
        key, sub = jax.random.split(key)
        keys = jax.random.split(sub, len(MSD_CFG) + 1)
        convs = [_conv_init(keys[i], c[0], c[1] // c[5], c[2])
                 for i, c in enumerate(MSD_CFG)]
        post = _conv_init(keys[-1], MSD_POST[0], MSD_POST[1], MSD_POST[2])
        params["msd"].append({"convs": convs, "post": post})
    return params


if __name__ == "__main__":
    key = jax.random.PRNGKey(0)
    kparams, ky, kg = jax.random.split(key, 3)
    params = init_discriminator_params(kparams)

    B, T = 2, 128  # small audio length, batch=2, mono channel (B, 1, T)
    y = jax.random.normal(ky, (B, 1, T), jnp.float32)
    y_hat = jax.random.normal(kg, (B, 1, T), jnp.float32)

    outs = discriminator_forward(params, y, y_hat)
    for leaf in jax.tree_util.tree_leaves(outs):
        jax.block_until_ready(leaf)
    print("KERNEL_OK")
</pallas_src>

<mosaic_0001>
module attributes {stable_mosaic.version = 11 : i64} {
  func.func @kernel(%arg0: i32, %arg1: i32, %arg2: i32, %arg3: memref<1x24x5xf32, #tpu.memory_space<vmem>>, %arg4: memref<1x1x5x128xbf16, #tpu.memory_space<vmem>>, %arg5: memref<1x1x128xf32, #tpu.memory_space<vmem>>, %arg6: memref<24x128xf32, #tpu.memory_space<vmem>>) attributes {dimension_semantics = [#tpu.dimension_semantics<parallel>, #tpu.dimension_semantics<parallel>, #tpu.dimension_semantics<parallel>], iteration_bounds = array<i64: 1, 1, 8>, scalar_prefetch = 0 : i64, scratch_operands = 0 : i64, tpu.core_type = #tpu.core_type<tc>, window_params = [{transform_indices = @transform_0, window_bounds = array<i64: 1, 24, 5>}, {transform_indices = @transform_1, window_bounds = array<i64: 1, 1, 5, 128>}, {transform_indices = @transform_2, window_bounds = array<i64: 1, 1, 128>}, {transform_indices = @transform_3, window_bounds = array<i64: 24, 128>}]} {
    %cst = arith.constant 0.000000e+00 : f32
    %0 = vector.broadcast %cst : f32 to vector<24x128xf32>
    %c0 = arith.constant 0 : index
    %c0_0 = arith.constant 0 : index
    %c0_1 = arith.constant 0 : index
    %1 = vector.load %arg5[%c0, %c0_0, %c0_1] : memref<1x1x128xf32, #tpu.memory_space<vmem>>, vector<1x1x128xf32>
    %2 = vector.shape_cast %1 : vector<1x1x128xf32> to vector<1x128xf32>
    %3 = vector.broadcast %2 : vector<1x128xf32> to vector<24x128xf32>
    %4 = arith.addf %0, %3 : vector<24x128xf32>
    %c0_2 = arith.constant 0 : index
    %c0_3 = arith.constant 0 : index
    %5 = vector.load %arg6[%c0_2, %c0_3] : memref<24x128xf32, #tpu.memory_space<vmem>>, vector<24x128xf32>
    tpu.vector_store %arg6[%c0_2, %c0_3], %4 {strides = array<i32>} : memref<24x128xf32, #tpu.memory_space<vmem>>, vector<24x128xf32>,
    %c0_4 = arith.constant 0 : index
    %c0_5 = arith.constant 0 : index
    %c0_6 = arith.constant 0 : index
    %6 = vector.load %arg3[%c0_4, %c0_5, %c0_6] : memref<1x24x5xf32, #tpu.memory_space<vmem>>, vector<1x24x5xf32>
    %7 = vector.shape_cast %6 : vector<1x24x5xf32> to vector<24x5xf32>
    %8 = arith.truncf %7 : vector<24x5xf32> to vector<24x5xbf16>
    %c0_7 = arith.constant 0 : index
    %c0_8 = arith.constant 0 : index
    %9 = vector.load %arg6[%c0_7, %c0_8] : memref<24x128xf32, #tpu.memory_space<vmem>>, vector<24x128xf32>
    %c0_9 = arith.constant 0 : index
    %c0_10 = arith.constant 0 : index
    %c0_11 = arith.constant 0 : index
    %c0_12 = arith.constant 0 : index
    %10 = vector.load %arg4[%c0_9, %c0_10, %c0_11, %c0_12] : memref<1x1x5x128xbf16, #tpu.memory_space<vmem>>, vector<1x1x5x128xbf16>
    %11 = vector.shape_cast %10 : vector<1x1x5x128xbf16> to vector<5x128xbf16>
    %cst_13 = arith.constant dense<0.000000e+00> : vector<24x128xf32>
    %12 = tpu.matmul %8, %11, %cst_13 {dimension_numbers = #tpu.dot_dimension_numbers<[1], [0], [0], [1], [0, 0, 1, 1], [], []>} : vector<24x5xbf16>, vector<5x128xbf16>, vector<24x128xf32> -> vector<24x128xf32>
    %13 = arith.addf %9, %12 : vector<24x128xf32>
    %c0_14 = arith.constant 0 : index
    %c0_15 = arith.constant 0 : index
    %14 = vector.load %arg6[%c0_14, %c0_15] : memref<24x128xf32, #tpu.memory_space<vmem>>, vector<24x128xf32>
    tpu.vector_store %arg6[%c0_14, %c0_15], %13 {strides = array<i32>} : memref<24x128xf32, #tpu.memory_space<vmem>>, vector<24x128xf32>,
    %c0_16 = arith.constant 0 : index
    %c0_17 = arith.constant 0 : index
    %15 = vector.load %arg6[%c0_16, %c0_17] : memref<24x128xf32, #tpu.memory_space<vmem>>, vector<24x128xf32>
    %cst_18 = arith.constant 0.000000e+00 : f32
    %16 = vector.broadcast %cst_18 : f32 to vector<24x128xf32>
    %17 = arith.cmpf oge, %15, %16 : vector<24x128xf32>
    %cst_19 = arith.constant 1.000000e-01 : f32
    %18 = vector.broadcast %cst_19 : f32 to vector<24x128xf32>
    %19 = arith.mulf %18, %15 : vector<24x128xf32>
    %20 = arith.select %17, %15, %19 : vector<24x128xi1>, vector<24x128xf32>
    %c0_20 = arith.constant 0 : index
    %c0_21 = arith.constant 0 : index
    %21 = vector.load %arg6[%c0_20, %c0_21] : memref<24x128xf32, #tpu.memory_space<vmem>>, vector<24x128xf32>
    tpu.vector_store %arg6[%c0_20, %c0_21], %20 {strides = array<i32>} : memref<24x128xf32, #tpu.memory_space<vmem>>, vector<24x128xf32>,
    return
  }
  func.func @transform_0(%arg0: i32, %arg1: i32, %arg2: i32) -> (i32, i32, i32) {
    %c0_i32 = arith.constant 0 : i32
    %c0_i32_0 = arith.constant 0 : i32
    return %arg2, %c0_i32, %arg0 : i32, i32, i32
  }
  func.func @transform_1(%arg0: i32, %arg1: i32, %arg2: i32) -> (i32, i32, i32, i32) {
    %c0_i32 = arith.constant 0 : i32
    %c0_i32_0 = arith.constant 0 : i32
    %c0_i32_1 = arith.constant 0 : i32
    return %arg0, %c0_i32, %c0_i32_0, %arg1 : i32, i32, i32, i32
  }
  func.func @transform_2(%arg0: i32, %arg1: i32, %arg2: i32) -> (i32, i32, i32) {
    %c0_i32 = arith.constant 0 : i32
    %c0_i32_0 = arith.constant 0 : i32
    return %arg0, %c0_i32, %arg1 : i32, i32, i32
  }
  func.func @transform_3(%arg0: i32, %arg1: i32, %arg2: i32) -> (i32, i32) {
    %c1_i32 = arith.constant 1 : i32
    %0 = arith.muli %arg0, %c1_i32 : i32
    %1 = arith.addi %0, %arg1 : i32
    %c0_i32 = arith.constant 0 : i32
    return %arg2, %1 : i32, i32
  }
}

</mosaic_0001>

<llo_original>
// kernel: impl.1
$region0: #{impl.1}
  #allocation0 [shape = 'u32[]', space=smem, size = 0x4, offset = 0x4, fixed_abs, tag = 'smem constant byte address 0x4 - core index']
  #allocation1 [shape = 'u32[144,128]{1,0:T(1,128)}', space=vmem, size = 0x12000, scoped, tag = 'internal scratch']
  %s0 = inlined_call_operand.vmem [shape: f32[8,24,5], index: 0, kind: input, shape index: {}]
  %s1 = inlined_call_operand.vmem [shape: bf16[1,1,5,128], index: 1, kind: input, shape index: {}]
  %s2 = inlined_call_operand.vmem [shape: f32[1,1,128], index: 2, kind: input, shape index: {}]
  %s3 = inlined_call_operand.vmem [shape: f32[192,128], index: 3, kind: output, shape index: {}]
  %s4 = sld [smem:[#allocation0]]
  $region45: #{impl.1} parent=0
    _
  %s6 = ssub.s32 1, %s4
  %s7 = scalar_select 0, %s6, %s4
  loop: start=0, step=1, limit=10
  $region2: #{impl.1} parent=0 // loop_pre_header
    _
  $region3: #{impl.1} parent=0 // loop_header
    %s9 = sphi 0, %s13
    %p10 = scmp.ge.s32.totalorder %s9, 10
    %s16 = sphi 0, %s35
    %s17 = sphi 0, %s31
    %s18 = sphi 0, %s27
    %s19 = sphi 0, %s16
    %s20 = sphi 0, %s17
    %s21 = sphi 0, %s18
    %s22 = sphi 0, %s19
    %s23 = sphi 0, %s20
    %s24 = sphi 0, %s21
    %s40 = sphi 0, %s42
    %s43 = sphi 0, %s40
    %s44 = sphi 0, %s43
    %s60 = sphi 0, %s44
    %s68 = sphi 0, %s70
    %s71 = sphi 0, %s68
    %s72 = sphi 0, %s71
    %s88 = sphi 0, %s72
    %s96 = sphi 0, %s98
    %s99 = sphi 0, %s96
    %s100 = sphi 0, %s99
    %s116 = sphi 0, %s100
    %s126 = sphi 0, %s128
    %s129 = sphi 0, %s126
    %s130 = sphi 0, %s129
    %s146 = sphi 0, %s130
  $region4: #{impl.1} parent=0 // loop_header_branch
    %12 = sbr.rel (%p10) target = $region8
  $region5: #{impl.1} parent=0 // loop_body
    %s14 = ssub.s32 %s9, 1
    %s15 = ssub.s32 %s9, 2
    %s25 = sadd.s32 1, %s18
    %p26 = scmp.ge.s32.totalorder %s25, 8
    %s27 = scalar_select %p26, 0, %s25
    %s28 = sadd.s32 1, %s17
    %s29 = scalar_select %p26, %s28, %s17
    %p30 = scmp.ge.s32.totalorder %s29, 1
    %s31 = scalar_select %p30, 0, %s29
    %s32 = sadd.s32 1, %s16
    %s33 = scalar_select %p30, %s32, %s16
    %p34 = scmp.ge.s32.totalorder %s33, 1
    %s35 = scalar_select %p34, 0, %s33
    %s36 = ssub.s32 %s18, %s27
    %s37 = ssub.s32 %s16, %s35
    %s38 = sor.u32 %s36, %s37
    %p39 = scmp.eq.s32.totalorder %s38, 0
    %s41 = sadd.s32 %s40, 1
    %s42 = scalar_select %p39, %s40, %s41
    %p45 = pneg %p39
    %p46 = scmp.eq.s32.totalorder %s9, 7
    %p47 = por %p45, %p46
    %p48 = scmp.ne.s32.totalorder %s40, %s43
    %p49 = scmp.eq.s32.totalorder %s9, 0
    %p50 = por %p48, %p49
    %p51 = scmp.ne.s32.totalorder %s40, %s43
    %p52 = scmp.eq.s32.totalorder %s14, 7
    %p53 = por %p51, %p52
    %p54 = scmp.ne.s32.totalorder %s43, %s44
    %p55 = scmp.eq.s32.totalorder %s14, 0
    %p56 = por %p54, %p55
    %p57 = scmp.ne.s32.totalorder %s43, %s44
    %p58 = scmp.eq.s32.totalorder %s15, 7
    %p59 = por %p57, %p58
    %p61 = scmp.ne.s32.totalorder %s44, %s60
    %p62 = scmp.eq.s32.totalorder %s15, 0
    %p63 = por %p61, %p62
    %s64 = ssub.s32 %s16, %s35
    %s65 = ssub.s32 %s17, %s31
    %s66 = sor.u32 %s64, %s65
    %p67 = scmp.eq.s32.totalorder %s66, 0
    %s69 = sadd.s32 %s68, 1
    %s70 = scalar_select %p67, %s68, %s69
    %p73 = pneg %p67
    %p74 = scmp.eq.s32.totalorder %s9, 7
    %p75 = por %p73, %p74
    %p76 = scmp.ne.s32.totalorder %s68, %s71
    %p77 = scmp.eq.s32.totalorder %s9, 0
    %p78 = por %p76, %p77
    %p79 = scmp.ne.s32.totalorder %s68, %s71
    %p80 = scmp.eq.s32.totalorder %s14, 7
    %p81 = por %p79, %p80
    %p82 = scmp.ne.s32.totalorder %s71, %s72
    %p83 = scmp.eq.s32.totalorder %s14, 0
    %p84 = por %p82, %p83
    %p85 = scmp.ne.s32.totalorder %s71, %s72
    %p86 = scmp.eq.s32.totalorder %s15, 7
    %p87 = por %p85, %p86
    %p89 = scmp.ne.s32.totalorder %s72, %s88
    %p90 = scmp.eq.s32.totalorder %s15, 0
    %p91 = por %p89, %p90
    %s92 = ssub.s32 %s16, %s35
    %s93 = ssub.s32 %s17, %s31
    %s94 = sor.u32 %s92, %s93
    %p95 = scmp.eq.s32.totalorder %s94, 0
    %s97 = sadd.s32 %s96, 1
    %s98 = scalar_select %p95, %s96, %s97
    %p101 = pneg %p95
    %p102 = scmp.eq.s32.totalorder %s9, 7
    %p103 = por %p101, %p102
    %p104 = scmp.ne.s32.totalorder %s96, %s99
    %p105 = scmp.eq.s32.totalorder %s9, 0
    %p106 = por %p104, %p105
    %p107 = scmp.ne.s32.totalorder %s96, %s99
    %p108 = scmp.eq.s32.totalorder %s14, 7
    %p109 = por %p107, %p108
    %p110 = scmp.ne.s32.totalorder %s99, %s100
    %p111 = scmp.eq.s32.totalorder %s14, 0
    %p112 = por %p110, %p111
    %p113 = scmp.ne.s32.totalorder %s99, %s100
    %p114 = scmp.eq.s32.totalorder %s15, 7
    %p115 = por %p113, %p114
    %p117 = scmp.ne.s32.totalorder %s100, %s116
    %p118 = scmp.eq.s32.totalorder %s15, 0
    %p119 = por %p117, %p118
    %s120 = sadd.s32 %s16, %s17
    %s121 = sadd.s32 %s35, %s31
    %s122 = ssub.s32 %s18, %s27
    %s123 = ssub.s32 %s120, %s121
    %s124 = sor.u32 %s122, %s123
    %p125 = scmp.eq.s32.totalorder %s124, 0
    %s127 = sadd.s32 %s126, 1
    %s128 = scalar_select %p125, %s126, %s127
    %p131 = pneg %p125
    %p132 = scmp.eq.s32.totalorder %s9, 7
    %p133 = por %p131, %p132
    %p134 = scmp.ne.s32.totalorder %s126, %s129
    %p135 = scmp.eq.s32.totalorder %s9, 0
    %p136 = por %p134, %p135
    %p137 = scmp.ne.s32.totalorder %s126, %s129
    %p138 = scmp.eq.s32.totalorder %s14, 7
    %p139 = por %p137, %p138
    %p140 = scmp.ne.s32.totalorder %s129, %s130
    %p141 = scmp.eq.s32.totalorder %s14, 0
    %p142 = por %p140, %p141
    %p143 = scmp.ne.s32.totalorder %s129, %s130
    %p144 = scmp.eq.s32.totalorder %s15, 7
    %p145 = por %p143, %p144
    %p147 = scmp.ne.s32.totalorder %s130, %s146
    %p148 = scmp.eq.s32.totalorder %s15, 0
    %p149 = por %p147, %p148
    %p150 = scmp.le.s32.totalorder 1, %s9
    %p151 = scmp.lt.s32.totalorder %s9, 9
    %p152 = pnand %p150, %p151
    %p153 = pneg %p152
    // Predicated region
    $region9: #{impl.1} parent=5 // pred_check
      _
    $region10: #{impl.1} parent=5 // pred_check_branch
      %155 = sbr.rel (%p152) target = $region12
    $region11: #{impl.1} parent=5 // pred_region
      %s156 = ssub.s32 %s9, 1
      // Predicated region
      $region13: #{impl.1} parent=11 // pred_check
        %p157 = pneg %p84
      $region14: #{impl.1} parent=11 // pred_check_branch
        %159 = sbr.rel (%p157) target = $region16
      $region15: #{impl.1} parent=11 // pred_region
        %p160 = scmp.lt.s32.totalorder %s19, 0
        %s161 = scalar_select %p160, %s19, 0
        %p162 = scmp.lt.s32.totalorder %s20, 0
        %s163 = scalar_select %p162, %s20, 0
        %s164 = sadd.s32 %s163, %s161
        %s165 = smul.addr %s164, 4
        %s166 = scalar_lea.vmem %s1, %s165
      $region16: #{impl.1} parent=11 // pred_fallthru
        _
      // Predicated region
      $region17: #{impl.1} parent=11 // pred_check
        %p167 = pneg %p112
      $region18: #{impl.1} parent=11 // pred_check_branch
        %169 = sbr.rel (%p167) target = $region20
      $region19: #{impl.1} parent=11 // pred_region
        %p170 = scmp.lt.s32.totalorder %s19, 0
        %s171 = scalar_select %p170, %s19, 0
        %p172 = scmp.lt.s32.totalorder %s20, 0
        %s173 = scalar_select %p172, %s20, 0
        %s174 = sadd.s32 %s173, %s171
        %s175 = scalar_lea.vmem %s2, %s174
      $region20: #{impl.1} parent=11 // pred_fallthru
        _
    $region12: #{impl.1} parent=5 // pred_fallthru
      _
    %p176 = scmp.lt.s32.totalorder %s9, 8
    // Predicated region
    $region21: #{impl.1} parent=5 // pred_check
      %p177 = pneg %p176
    $region22: #{impl.1} parent=5 // pred_check_branch
      %179 = sbr.rel (%p177) target = $region24
    $region23: #{impl.1} parent=5 // pred_region
      // Predicated region
      $region25: #{impl.1} parent=23 // pred_check
        %p180 = pneg %p50
      $region26: #{impl.1} parent=23 // pred_check_branch
        %182 = sbr.rel (%p180) target = $region28
      $region27: #{impl.1} parent=23 // pred_region
        %p183 = scmp.lt.s32.totalorder %s18, 7
        %s184 = scalar_select %p183, %s18, 7
        %p185 = scmp.lt.s32.totalorder %s16, 0
        %s186 = scalar_select %p185, %s16, 0
        %s187 = smul.addr %s184, 3
        %s188 = sadd.s32 %s186, %s187
        %s189 = smul.addr %s188, 8
        %s190 = scalar_lea.vmem %s0, %s189
      $region28: #{impl.1} parent=23 // pred_fallthru
        _
    $region24: #{impl.1} parent=5 // pred_fallthru
      _
    %p191 = scmp.le.s32.totalorder 1, %s9
    %p192 = scmp.lt.s32.totalorder %s9, 9
    %p193 = pnand %p191, %p192
    %p194 = pneg %p193
    // Predicated region
    $region29: #{impl.1} parent=5 // pred_check
      _
    $region30: #{impl.1} parent=5 // pred_check_branch
      %196 = sbr.rel (%p193) target = $region32
    $region31: #{impl.1} parent=5 // pred_region
      %s197 = ssub.s32 %s9, 1
      %p198 = scmp.lt.s32.totalorder %s21, 7
      %s199 = scalar_select %p198, %s21, 7
      %p200 = scmp.lt.s32.totalorder %s19, 0
      %s201 = scalar_select %p200, %s19, 0
      %s202 = smul.addr %s199, 3
      %s203 = sadd.s32 %s201, %s202
      %s204 = smul.addr %s203, 8
      %s205 = scalar_lea.vmem %s0, %s204
      %p206 = pneg %p56
      %p207 = pneg %p53
      %p208 = scmp.lt.s32.totalorder %s19, 0
      %s209 = scalar_select %p208, %s19, 0
      %p210 = scmp.lt.s32.totalorder %s20, 0
      %s211 = scalar_select %p210, %s20, 0
      %s212 = sadd.s32 %s211, %s209
      %s213 = smul.addr %s212, 4
      %s214 = scalar_lea.vmem %s1, %s213
      %p215 = pneg %p84
      %p216 = pneg %p81
      %p217 = scmp.lt.s32.totalorder %s19, 0
      %s218 = scalar_select %p217, %s19, 0
      %p219 = scmp.lt.s32.totalorder %s20, 0
      %s220 = scalar_select %p219, %s20, 0
      %s221 = sadd.s32 %s220, %s218
      %s222 = scalar_lea.vmem %s2, %s221
      %p223 = pneg %p112
      %p224 = pneg %p109
      %p225 = pneg %p142
      %p226 = pneg %p139
      %s227 = sadd.s32 %s19, %s20
      %s228 = smul.u32 3, %s21
      %p229 = scmp.lt.s32.totalorder %s228, 23
      %s230 = scalar_select %p229, %s228, 23
      %p231 = scmp.lt.s32.totalorder %s227, 0
      %s232 = scalar_select %p231, %s227, 0
      %s233 = sadd.s32 %s232, %s230
      %s234 = smul.addr %s233, 8
      %s235 = scalar_lea.vmem %s3, %s234
      %p236 = scmp.lt.s32.totalorder %s21, 7
      %s237 = scalar_select %p236, %s21, 7
      %p238 = scmp.lt.s32.totalorder %s19, 0
      %s239 = scalar_select %p238, %s19, 0
      %s240 = smul.addr %s237, 3
      %s241 = sadd.s32 %s239, %s240
      %s242 = smul.addr %s241, 8
      %s243 = scalar_lea.vmem %s0, %s242
      %p244 = scmp.lt.s32.totalorder %s19, 0
      %s245 = scalar_select %p244, %s19, 0
      %p246 = scmp.lt.s32.totalorder %s20, 0
      %s247 = scalar_select %p246, %s20, 0
      %s248 = sadd.s32 %s247, %s245
      %s249 = smul.addr %s248, 4
      %s250 = scalar_lea.vmem %s1, %s249
      %p251 = scmp.lt.s32.totalorder %s19, 0
      %s252 = scalar_select %p251, %s19, 0
      %p253 = scmp.lt.s32.totalorder %s20, 0
      %s254 = scalar_select %p253, %s20, 0
      %s255 = sadd.s32 %s254, %s252
      %s256 = scalar_lea.vmem %s2, %s255
      %s257 = sadd.s32 %s19, %s20
      %s258 = smul.u32 3, %s21
      %p259 = scmp.lt.s32.totalorder %s258, 23
      %s260 = scalar_select %p259, %s258, 23
      %p261 = scmp.lt.s32.totalorder %s257, 0
      %s262 = scalar_select %p261, %s257, 0
      %s263 = sadd.s32 %s262, %s260
      %s264 = smul.addr %s263, 8
      %s265 = scalar_lea.vmem %s3, %s264
      %s266 = sadd.s32 %s19, %s20
      %s267 = smul.u32 3, %s21
      %v269 = vld [vmem:[%s256] sm:$0x1]
      %v271 = vlaneseq
      %v272 = vshrl.u32 %v271, 7
      %v273 = vsub.s32 0, %v272
      %v274 = vrot.slane %v269, %v273
      %v276 = vadd.f32 %v274, 0.0
      %277 = vst [vmem:[%s265] sm:$0xff] %v276
      %278 = vst [vmem:[%s265 + $0x8] sm:$0xff] %v276
      %279 = vst [vmem:[%s265 + $0x10] sm:$0xff] %v276
      %v280 = vld [vmem:[%s243] sm:$0xff]
      %v281 = vld [vmem:[%s243 + $0x8] sm:$0xff]
      %v282 = vld [vmem:[%s243 + $0x10] sm:$0xff]
      %v283 = vpack.c.bf16 %v281, %v280
      %v284 = vpack.c.bf16 %v282, %v282
      %v285 = vld [vmem:[%s265] sm:$0xff]
      %v286 = vld [vmem:[%s265 + $0x8] sm:$0xff]
      %v287 = vld [vmem:[%s265 + $0x10] sm:$0xff]
      %v288 = vld [vmem:[%s250] sm:$0x7]
      %vm289 = vcmask 39936
      %v291 = vsel %vm289, %v283, 0
      %v294 = vsel %vm289, %v284, 0
      %vm296 = vcmask 1041408
      %vm297 = vcmask 1042432
      %v298 = vsel %vm296, 4294967295, 65535
      %v299 = vsel %vm297, %v298, 0
      %v301 = vand.u32 %v288, %v299
      %303 = vmatprep.subr.bf16.mxu0 0
      %304 = vmatpush1.bf16.msra.mxu0 0
      %305 = vmatprep.subr.bf16.mxu0 0
      %306 = vmatpush1.bf16.msra.mxu0 0
      %307 = vmatprep.subr.bf16.mxu0 0
      %308 = vmatpush1.bf16.msra.mxu0 0
      %309 = vmatprep.subr.bf16.mxu0 0
      %310 = vmatpush1.bf16.msra.mxu0 0
      %311 = vmatprep.subr.bf16.mxu0 0
      %312 = vmatpush1.bf16.msra.mxu0 0
      %313 = vmatprep.subr.bf16.mxu0 0
      %314 = vmatpush1.bf16.msra.mxu0 0
      %315 = vmatprep.subr.bf16.mxu0 0
      %316 = vmatpush1.bf16.msra.mxu0 0
      %317 = vmatprep.subr.bf16.mxu0 0
      %318 = vmatpush1.bf16.msra.mxu0 %v301
      %319 = vmatprep.subr.bf16.mxu0 0
      %320 = vmatpush2.bf16.msra.mxu0 0
      %321 = vmatprep.subr.bf16.mxu0 0
      %322 = vmatpush2.bf16.msra.mxu0 0
      %323 = vmatprep.subr.bf16.mxu0 0
      %324 = vmatpush2.bf16.msra.mxu0 0
      %325 = vmatprep.subr.bf16.mxu0 0
      %326 = vmatpush2.bf16.msra.mxu0 0
      %327 = vmatprep.subr.bf16.mxu0 0
      %328 = vmatpush2.bf16.msra.mxu0 0
      %329 = vmatprep.subr.bf16.mxu0 0
      %330 = vmatpush2.bf16.msra.mxu0 0
      %331 = vmatprep.subr.bf16.mxu0 0
      %332 = vmatpush2.bf16.msra.mxu0 0
      %333 = vmatprep.subr.bf16.mxu0 0
      %334 = vmatpush2.bf16.msra.mxu0 0
      %335 = vmatprep.mubr.bf16.mxu0 0
      %336 = vmatmul.mubr.bf16.gmra.mxu0 %v291
      %v337 = vpop.f32.mrf.mxu0
      %v338 = vadd.f32 0.0, %v337
      %v339 = vpop.f32.mrf.mxu0
      %v340 = vpop.f32.mrf.mxu0
      %v341 = vadd.f32 0.0, %v340
      %v342 = vpop.f32.mrf.mxu0
      %343 = vmatprep.mubr.bf16.mxu0 0
      %344 = vmatmul.mubr.bf16.gmra.mxu0 %v294
      %v345 = vpop.f32.mrf.mxu0
      %v346 = vadd.f32 0.0, %v345
      %v347 = vpop.f32.mrf.mxu0
      %v348 = vpop.f32.mrf.mxu0
      %v349 = vpop.f32.mrf.mxu0
      %350 = vdwg.mxu0
      %v351 = vadd.f32 %v285, %v338
      %v352 = vadd.f32 %v286, %v341
      %v353 = vadd.f32 %v287, %v346
      %354 = vst [vmem:[%s265] sm:$0xff] %v351
      %355 = vst [vmem:[%s265 + $0x8] sm:$0xff] %v352
      %356 = vst [vmem:[%s265 + $0x10] sm:$0xff] %v353
      %v357 = vld [vmem:[%s265] sm:$0xff]
      %v358 = vld [vmem:[%s265 + $0x8] sm:$0xff]
      %v359 = vld [vmem:[%s265 + $0x10] sm:$0xff]
      %vm360 = vcmp.ge.f32.partialorder %v357, 0.0
      %vm361 = vcmp.ge.f32.partialorder %v358, 0.0
      %vm362 = vcmp.ge.f32.partialorder %v359, 0.0
      %v363 = vmul.f32 %v357, 0.1
      %v364 = vmul.f32 %v358, 0.1
      %v365 = vmul.f32 %v359, 0.1
      %v366 = vsel %vm360, %v357, %v363
      %v367 = vsel %vm361, %v358, %v364
      %v368 = vsel %vm362, %v359, %v365
      %369 = vst [vmem:[%s265] sm:$0xff] %v366
      %370 = vst [vmem:[%s265 + $0x8] sm:$0xff] %v367
      %371 = vst [vmem:[%s265 + $0x10] sm:$0xff] %v368
      %s372 = sadd.s32 %s19, %s20
      %s373 = smul.u32 3, %s21
      %p374 = scmp.lt.s32.totalorder %s373, 23
      %s375 = scalar_select %p374, %s373, 23
      %p376 = scmp.lt.s32.totalorder %s372, 0
      %s377 = scalar_select %p376, %s372, 0
      %s378 = sadd.s32 %s377, %s375
      %s379 = smul.addr %s378, 8
      %s380 = scalar_lea.vmem %s3, %s379
      // Predicated region
      $region33: #{impl.1} parent=31 // pred_check
        %p381 = pneg %p139
      $region34: #{impl.1} parent=31 // pred_check_branch
        %383 = sbr.rel (%p381) target = $region36
      $region35: #{impl.1} parent=31 // pred_region
        %s384 = sadd.s32 %s19, %s20
        %s385 = smul.u32 3, %s21
      $region36: #{impl.1} parent=31 // pred_fallthru
        _
    $region32: #{impl.1} parent=5 // pred_fallthru
      _
    %p386 = scmp.le.s32.totalorder 2, %s9
    // Predicated region
    $region37: #{impl.1} parent=5 // pred_check
      %p387 = pneg %p386
    $region38: #{impl.1} parent=5 // pred_check_branch
      %389 = sbr.rel (%p387) target = $region40
    $region39: #{impl.1} parent=5 // pred_region
      %s390 = ssub.s32 %s9, 2
      // Predicated region
      $region41: #{impl.1} parent=39 // pred_check
        %p391 = pneg %p145
      $region42: #{impl.1} parent=39 // pred_check_branch
        %393 = sbr.rel (%p391) target = $region44
      $region43: #{impl.1} parent=39 // pred_region
        %s394 = sadd.s32 %s22, %s23
        %s395 = smul.u32 3, %s24
        %p396 = scmp.lt.s32.totalorder %s395, 23
        %s397 = scalar_select %p396, %s395, 23
        %p398 = scmp.lt.s32.totalorder %s394, 0
        %s399 = scalar_select %p398, %s394, 0
        %s400 = sadd.s32 %s399, %s397
        %s401 = smul.addr %s400, 8
        %s402 = scalar_lea.vmem %s3, %s401
      $region44: #{impl.1} parent=39 // pred_fallthru
        _
    $region40: #{impl.1} parent=5 // pred_fallthru
      _
  $region6: #{impl.1} parent=0 // loop_footer
    %s13 = sadd.s32 1, %s9
  $region7: #{impl.1} parent=0 // loop_footer_branch
    %8 = sbr.rel target = $region3
  $region8: #{impl.1} parent=0 // loop_exit
    _

</llo_original>
